<compile_context>
chip_gen: v6e
topology: v6e:2x2x1
jax: 0.10.0
libtpu: 0.0.40
codegen_flags: <defaults>
</compile_context>

<pallas_src>
import jax
import jax.numpy as jnp
from jax.experimental import pallas as pl
from jax.experimental.pallas import tpu as pltpu

NEG_SLOPE = 0.01   # nn.LeakyReLU default negative_slope
SUBLANE = 8
TB_MAX = 1024      # batch tile cap: multiple of 256 (v6e/v7x MXU) and 128 (v5e)


def _leaky_relu(x):
    return jnp.where(x > 0, x, NEG_SLOPE * x)


def _round_up(n, m):
    return ((n + m - 1) // m) * m


def _choose_batch_tiling(b):
    """Pick (padded_batch, tile) so that tile is sublane-aligned, capped at
    TB_MAX, and the grid has >= 2 steps whenever the batch can be split
    (so the 'parallel' axis shards across v7x's two TensorCores)."""
    bp = _round_up(b, SUBLANE)
    if bp >= 2 * TB_MAX:
        tb = TB_MAX
    elif bp >= 2 * SUBLANE:
        tb = _round_up((bp + 1) // 2, SUBLANE)
    else:
        tb = bp
    return _round_up(bp, tb), tb


# ---------------------------------------------------------------------------
# Fused kernel: bottoms (implicit concat via column-disjoint weights)
#               -> fc1 -> fc2 -> fc3, all LeakyReLU, one batch tile per step.
# ---------------------------------------------------------------------------
def make_vfl_kernel(n_clients):
    def kernel(*refs):
        x_refs = refs[:n_clients]
        wb_refs = refs[n_clients:2 * n_clients]
        (bb_ref, w1_ref, b1_ref, w2_ref, b2_ref,
         w3_ref, b3_ref, o_ref) = refs[2 * n_clients:]

        # Bottom models.  Each client's weight is zero-padded along the output
        # columns to the full concat width, so summing the per-client matmuls
        # IS torch.cat(local_outs, dim=1).  These GEMMs are <2% of the MACs
        # (K = 4..7), so they stay f32.
        h = jnp.dot(x_refs[0][...], wb_refs[0][...],
                    preferred_element_type=jnp.float32)
        for xr, wr in zip(x_refs[1:], wb_refs[1:]):
            h = h + jnp.dot(xr[...], wr[...],
                            preferred_element_type=jnp.float32)
        h = _leaky_relu(h + bb_ref[...])

        # TopModel fc1/fc2/fc3: bf16 MXU matmuls, f32 accumulate; bias add and
        # LeakyReLU stay f32 on the VPU (v5e has no bf16 VALU).
        h = _leaky_relu(
            jnp.dot(h.astype(jnp.bfloat16), w1_ref[...],
                    preferred_element_type=jnp.float32) + b1_ref[...])
        h = _leaky_relu(
            jnp.dot(h.astype(jnp.bfloat16), w2_ref[...],
                    preferred_element_type=jnp.float32) + b2_ref[...])
        h = _leaky_relu(
            jnp.dot(h.astype(jnp.bfloat16), w3_ref[...],
                    preferred_element_type=jnp.float32) + b3_ref[...])

        # Dropout(0.1) is identity in eval mode.
        o_ref[...] = h.astype(o_ref.dtype)

    return kernel


# ---------------------------------------------------------------------------
# One-time parameter packing (column-disjoint bottom weights, bf16 top weights)
# ---------------------------------------------------------------------------
def pack_params(bottom_params, top_params):
    out_dims = [int(w.shape[1]) for w, _ in bottom_params]
    n_concat = sum(out_dims)                      # TopModel.in_size

    wb_list = []
    b_bot = jnp.zeros((1, n_concat), jnp.float32)
    c = 0
    for (w, bias) in bottom_params:
        wp = jnp.zeros((int(w.shape[0]), n_concat), jnp.float32)
        wp = wp.at[:, c:c + w.shape[1]].set(w)    # this client's column range
        wb_list.append(wp)
        b_bot = b_bot.at[0, c:c + w.shape[1]].set(bias)
        c += int(w.shape[1])

    (w1, b1), (w2, b2), (w3, b3) = top_params
    return dict(
        n_out=int(w3.shape[1]),
        wb_list=tuple(wb_list),                   # f32, (d_in_i, n_concat)
        b_bot=b_bot,                              # f32, (1, n_concat)
        w1=w1.astype(jnp.bfloat16), b1=b1.reshape(1, -1).astype(jnp.float32),
        w2=w2.astype(jnp.bfloat16), b2=b2.reshape(1, -1).astype(jnp.float32),
        w3=w3.astype(jnp.bfloat16), b3=b3.reshape(1, -1).astype(jnp.float32),
    )


# ---------------------------------------------------------------------------
# Wrapper: single fused pallas_call with a 1-D batch grid
# ---------------------------------------------------------------------------
def vfl_forward(xs, packed):
    """VFLNetwork.forward (eval): bottoms -> concat -> TopModel, one kernel."""
    wb_list = packed["wb_list"]
    b_bot, w1, b1, w2, b2, w3, b3 = (packed["b_bot"], packed["w1"], packed["b1"],
                                     packed["w2"], packed["b2"],
                                     packed["w3"], packed["b3"])
    n_out = packed["n_out"]
    n_cli = len(xs)

    b = int(xs[0].shape[0])
    bp, tb = _choose_batch_tiling(b)

    xs_f32 = [x.astype(jnp.float32) for x in xs]
    if bp != b:                                   # only pad rows when needed
        xs_f32 = [jnp.pad(x, ((0, bp - b), (0, 0))) for x in xs_f32]

    x_map = lambda i: (i, 0)
    w_map = lambda i: (0, 0)   # constant index_map -> weights stay VMEM-resident

    in_specs = (
        [pl.BlockSpec((tb, x.shape[1]), x_map) for x in xs_f32] +
        [pl.BlockSpec(w.shape, w_map) for w in wb_list] +
        [pl.BlockSpec(a.shape, w_map)
         for a in (b_bot, w1, b1, w2, b2, w3, b3)]
    )

    out = pl.pallas_call(
        make_vfl_kernel(n_cli),
        out_shape=jax.ShapeDtypeStruct((bp, n_out), jnp.float32),
        grid=(bp // tb,),
        in_specs=in_specs,
        out_specs=pl.BlockSpec((tb, n_out), x_map),
        compiler_params=pltpu.CompilerParams(
            dimension_semantics=("parallel",),
            vmem_limit_bytes=32 * 1024 * 1024),
    )(*xs_f32, *wb_list, b_bot, w1, b1, w2, b2, w3, b3)

    return out if bp == b else out[:b]


# ---------------------------------------------------------------------------
# Deterministic init (PyTorch nn.Linear default: U(-k, k), k = 1/sqrt(in))
# ---------------------------------------------------------------------------
def init_linear(key, in_dim, out_dim):
    kw, kb = jax.random.split(key)
    bound = 1.0 / jnp.sqrt(in_dim)
    w = jax.random.uniform(kw, (in_dim, out_dim), jnp.float32, -bound, bound)
    b = jax.random.uniform(kb, (out_dim,), jnp.float32, -bound, bound)
    return w, b


def reference_forward(xs, bottom_params, top_params):
    """Pure-JAX reference mirroring the kernel's numerics: f32 bottom GEMMs,
    bf16-input / f32-accumulate top GEMMs (Dropout identity in eval)."""
    hp = jax.lax.Precision.HIGHEST
    outs = [_leaky_relu(jnp.dot(x, w, precision=hp) + b)
            for x, (w, b) in zip(xs, bottom_params)]
    h = jnp.concatenate(outs, axis=1)

    def mm(a, w):
        return jnp.dot(a.astype(jnp.bfloat16), w.astype(jnp.bfloat16),
                       preferred_element_type=jnp.float32)

    (w1, b1), (w2, b2), (w3, b3) = top_params
    h = _leaky_relu(mm(h, w1) + b1)
    h = _leaky_relu(mm(h, w2) + b2)
    h = _leaky_relu(mm(h, w3) + b3)
    return h


if __name__ == "__main__":
    key = jax.random.PRNGKey(0)

    cli_in_dims = [5, 7, 4]        # per-client raw feature counts
    cli_out_dims = [8, 8, 16]      # local_out_dim of each bottom model
    in_size = sum(cli_out_dims)    # TopModel.in_size = 32

    # Bottom-model params
    bottom_params = []
    for d_in, d_out in zip(cli_in_dims, cli_out_dims):
        key, sub = jax.random.split(key)
        bottom_params.append(init_linear(sub, d_in, d_out))

    # TopModel params: fc1 (in_size->128), fc2 (128->256), fc3 (256->2)
    key, k1, k2, k3 = jax.random.split(key, 4)
    top_params = (init_linear(k1, in_size, 128),
                  init_linear(k2, 128, 256),
                  init_linear(k3, 256, 2))

    packed = pack_params(bottom_params, top_params)

    def run_check(batch):
        nonlocal_key = jax.random.fold_in(jax.random.PRNGKey(1), batch)
        xs = []
        kk = nonlocal_key
        for d_in in cli_in_dims:
            kk, sub = jax.random.split(kk)
            xs.append(jax.random.normal(sub, (batch, d_in), jnp.float32))
        out = jax.block_until_ready(vfl_forward(xs, packed))
        assert out.shape == (batch, 2) and out.dtype == jnp.float32
        ref = jax.block_until_ready(
            reference_forward(xs, bottom_params, top_params))
        assert jnp.allclose(out, ref, rtol=1e-2, atol=1e-2), (
            f"batch={batch} max abs diff {float(jnp.max(jnp.abs(out - ref)))}")

    run_check(8)    # small-batch latency path: single grid step, no padding
    run_check(40)   # padded batch, 2 grid steps (exercises multi-tile path)

    print("KERNEL_OK")
</pallas_src>

<mosaic_0001>
module attributes {stable_mosaic.version = 11 : i64} {
  func.func @kernel(%arg0: i32, %arg1: memref<8x5xf32, #tpu.memory_space<vmem>>, %arg2: memref<8x7xf32, #tpu.memory_space<vmem>>, %arg3: memref<8x4xf32, #tpu.memory_space<vmem>>, %arg4: memref<5x32xf32, #tpu.memory_space<vmem>>, %arg5: memref<7x32xf32, #tpu.memory_space<vmem>>, %arg6: memref<4x32xf32, #tpu.memory_space<vmem>>, %arg7: memref<1x32xf32, #tpu.memory_space<vmem>>, %arg8: memref<32x128xbf16, #tpu.memory_space<vmem>>, %arg9: memref<1x128xf32, #tpu.memory_space<vmem>>, %arg10: memref<128x256xbf16, #tpu.memory_space<vmem>>, %arg11: memref<1x256xf32, #tpu.memory_space<vmem>>, %arg12: memref<256x2xbf16, #tpu.memory_space<vmem>>, %arg13: memref<1x2xf32, #tpu.memory_space<vmem>>, %arg14: memref<8x2xf32, #tpu.memory_space<vmem>>) attributes {dimension_semantics = [#tpu.dimension_semantics<parallel>], iteration_bounds = array<i64: 1>, scalar_prefetch = 0 : i64, scratch_operands = 0 : i64, tpu.core_type = #tpu.core_type<tc>, window_params = [{transform_indices = @transform_0, window_bounds = array<i64: 8, 5>}, {transform_indices = @transform_1, window_bounds = array<i64: 8, 7>}, {transform_indices = @transform_2, window_bounds = array<i64: 8, 4>}, {pipeline_mode = #tpu.pipeline_mode<synchronous>, transform_indices = @transform_3, window_bounds = array<i64: 5, 32>}, {pipeline_mode = #tpu.pipeline_mode<synchronous>, transform_indices = @transform_4, window_bounds = array<i64: 7, 32>}, {pipeline_mode = #tpu.pipeline_mode<synchronous>, transform_indices = @transform_5, window_bounds = array<i64: 4, 32>}, {pipeline_mode = #tpu.pipeline_mode<synchronous>, transform_indices = @transform_6, window_bounds = array<i64: 1, 32>}, {pipeline_mode = #tpu.pipeline_mode<synchronous>, transform_indices = @transform_7, window_bounds = array<i64: 32, 128>}, {pipeline_mode = #tpu.pipeline_mode<synchronous>, transform_indices = @transform_8, window_bounds = array<i64: 1, 128>}, {pipeline_mode = #tpu.pipeline_mode<synchronous>, transform_indices = @transform_9, window_bounds = array<i64: 128, 256>}, {pipeline_mode = #tpu.pipeline_mode<synchronous>, transform_indices = @transform_10, window_bounds = array<i64: 1, 256>}, {pipeline_mode = #tpu.pipeline_mode<synchronous>, transform_indices = @transform_11, window_bounds = array<i64: 256, 2>}, {pipeline_mode = #tpu.pipeline_mode<synchronous>, transform_indices = @transform_12, window_bounds = array<i64: 1, 2>}, {transform_indices = @transform_13, window_bounds = array<i64: 8, 2>}]} {
    %c0 = arith.constant 0 : index
    %c0_0 = arith.constant 0 : index
    %0 = vector.load %arg1[%c0, %c0_0] : memref<8x5xf32, #tpu.memory_space<vmem>>, vector<8x5xf32>
    %c0_1 = arith.constant 0 : index
    %c0_2 = arith.constant 0 : index
    %1 = vector.load %arg4[%c0_1, %c0_2] : memref<5x32xf32, #tpu.memory_space<vmem>>, vector<5x32xf32>
    %cst = arith.constant dense<0.000000e+00> : vector<8x32xf32>
    %2 = tpu.matmul %0, %1, %cst {dimension_numbers = #tpu.dot_dimension_numbers<[1], [0], [0], [1], [0, 0, 1, 1], [], []>} : vector<8x5xf32>, vector<5x32xf32>, vector<8x32xf32> -> vector<8x32xf32>
    %c0_3 = arith.constant 0 : index
    %c0_4 = arith.constant 0 : index
    %3 = vector.load %arg2[%c0_3, %c0_4] : memref<8x7xf32, #tpu.memory_space<vmem>>, vector<8x7xf32>
    %c0_5 = arith.constant 0 : index
    %c0_6 = arith.constant 0 : index
    %4 = vector.load %arg5[%c0_5, %c0_6] : memref<7x32xf32, #tpu.memory_space<vmem>>, vector<7x32xf32>
    %cst_7 = arith.constant dense<0.000000e+00> : vector<8x32xf32>
    %5 = tpu.matmul %3, %4, %cst_7 {dimension_numbers = #tpu.dot_dimension_numbers<[1], [0], [0], [1], [0, 0, 1, 1], [], []>} : vector<8x7xf32>, vector<7x32xf32>, vector<8x32xf32> -> vector<8x32xf32>
    %6 = arith.addf %2, %5 : vector<8x32xf32>
    %c0_8 = arith.constant 0 : index
    %c0_9 = arith.constant 0 : index
    %7 = vector.load %arg3[%c0_8, %c0_9] : memref<8x4xf32, #tpu.memory_space<vmem>>, vector<8x4xf32>
    %c0_10 = arith.constant 0 : index
    %c0_11 = arith.constant 0 : index
    %8 = vector.load %arg6[%c0_10, %c0_11] : memref<4x32xf32, #tpu.memory_space<vmem>>, vector<4x32xf32>
    %cst_12 = arith.constant dense<0.000000e+00> : vector<8x32xf32>
    %9 = tpu.matmul %7, %8, %cst_12 {dimension_numbers = #tpu.dot_dimension_numbers<[1], [0], [0], [1], [0, 0, 1, 1], [], []>} : vector<8x4xf32>, vector<4x32xf32>, vector<8x32xf32> -> vector<8x32xf32>
    %10 = arith.addf %6, %9 : vector<8x32xf32>
    %c0_13 = arith.constant 0 : index
    %c0_14 = arith.constant 0 : index
    %11 = vector.load %arg7[%c0_13, %c0_14] : memref<1x32xf32, #tpu.memory_space<vmem>>, vector<1x32xf32>
    %12 = vector.broadcast %11 : vector<1x32xf32> to vector<8x32xf32>
    %13 = arith.addf %10, %12 : vector<8x32xf32>
    %cst_15 = arith.constant 0.000000e+00 : f32
    %14 = vector.broadcast %cst_15 : f32 to vector<8x32xf32>
    %15 = arith.cmpf ogt, %13, %14 : vector<8x32xf32>
    %cst_16 = arith.constant 0.00999999977 : f32
    %16 = vector.broadcast %cst_16 : f32 to vector<8x32xf32>
    %17 = arith.mulf %16, %13 : vector<8x32xf32>
    %18 = arith.select %15, %13, %17 : vector<8x32xi1>, vector<8x32xf32>
    %19 = arith.truncf %18 : vector<8x32xf32> to vector<8x32xbf16>
    %c0_17 = arith.constant 0 : index
    %c0_18 = arith.constant 0 : index
    %20 = vector.load %arg8[%c0_17, %c0_18] : memref<32x128xbf16, #tpu.memory_space<vmem>>, vector<32x128xbf16>
    %cst_19 = arith.constant dense<0.000000e+00> : vector<8x128xf32>
    %21 = tpu.matmul %19, %20, %cst_19 {dimension_numbers = #tpu.dot_dimension_numbers<[1], [0], [0], [1], [0, 0, 1, 1], [], []>} : vector<8x32xbf16>, vector<32x128xbf16>, vector<8x128xf32> -> vector<8x128xf32>
    %c0_20 = arith.constant 0 : index
    %c0_21 = arith.constant 0 : index
    %22 = vector.load %arg9[%c0_20, %c0_21] : memref<1x128xf32, #tpu.memory_space<vmem>>, vector<1x128xf32>
    %23 = vector.broadcast %22 : vector<1x128xf32> to vector<8x128xf32>
    %24 = arith.addf %21, %23 : vector<8x128xf32>
    %cst_22 = arith.constant 0.000000e+00 : f32
    %25 = vector.broadcast %cst_22 : f32 to vector<8x128xf32>
    %26 = arith.cmpf ogt, %24, %25 : vector<8x128xf32>
    %cst_23 = arith.constant 0.00999999977 : f32
    %27 = vector.broadcast %cst_23 : f32 to vector<8x128xf32>
    %28 = arith.mulf %27, %24 : vector<8x128xf32>
    %29 = arith.select %26, %24, %28 : vector<8x128xi1>, vector<8x128xf32>
    %30 = arith.truncf %29 : vector<8x128xf32> to vector<8x128xbf16>
    %c0_24 = arith.constant 0 : index
    %c0_25 = arith.constant 0 : index
    %31 = vector.load %arg10[%c0_24, %c0_25] : memref<128x256xbf16, #tpu.memory_space<vmem>>, vector<128x256xbf16>
    %cst_26 = arith.constant dense<0.000000e+00> : vector<8x256xf32>
    %32 = tpu.matmul %30, %31, %cst_26 {dimension_numbers = #tpu.dot_dimension_numbers<[1], [0], [0], [1], [0, 0, 1, 1], [], []>} : vector<8x128xbf16>, vector<128x256xbf16>, vector<8x256xf32> -> vector<8x256xf32>
    %c0_27 = arith.constant 0 : index
    %c0_28 = arith.constant 0 : index
    %33 = vector.load %arg11[%c0_27, %c0_28] : memref<1x256xf32, #tpu.memory_space<vmem>>, vector<1x256xf32>
    %34 = vector.broadcast %33 : vector<1x256xf32> to vector<8x256xf32>
    %35 = arith.addf %32, %34 : vector<8x256xf32>
    %cst_29 = arith.constant 0.000000e+00 : f32
    %36 = vector.broadcast %cst_29 : f32 to vector<8x256xf32>
    %37 = arith.cmpf ogt, %35, %36 : vector<8x256xf32>
    %cst_30 = arith.constant 0.00999999977 : f32
    %38 = vector.broadcast %cst_30 : f32 to vector<8x256xf32>
    %39 = arith.mulf %38, %35 : vector<8x256xf32>
    %40 = arith.select %37, %35, %39 : vector<8x256xi1>, vector<8x256xf32>
    %41 = arith.truncf %40 : vector<8x256xf32> to vector<8x256xbf16>
    %c0_31 = arith.constant 0 : index
    %c0_32 = arith.constant 0 : index
    %42 = vector.load %arg12[%c0_31, %c0_32] : memref<256x2xbf16, #tpu.memory_space<vmem>>, vector<256x2xbf16>
    %cst_33 = arith.constant dense<0.000000e+00> : vector<8x2xf32>
    %43 = tpu.matmul %41, %42, %cst_33 {dimension_numbers = #tpu.dot_dimension_numbers<[1], [0], [0], [1], [0, 0, 1, 1], [], []>} : vector<8x256xbf16>, vector<256x2xbf16>, vector<8x2xf32> -> vector<8x2xf32>
    %c0_34 = arith.constant 0 : index
    %c0_35 = arith.constant 0 : index
    %44 = vector.load %arg13[%c0_34, %c0_35] : memref<1x2xf32, #tpu.memory_space<vmem>>, vector<1x2xf32>
    %45 = vector.broadcast %44 : vector<1x2xf32> to vector<8x2xf32>
    %46 = arith.addf %43, %45 : vector<8x2xf32>
    %cst_36 = arith.constant 0.000000e+00 : f32
    %47 = vector.broadcast %cst_36 : f32 to vector<8x2xf32>
    %48 = arith.cmpf ogt, %46, %47 : vector<8x2xf32>
    %cst_37 = arith.constant 0.00999999977 : f32
    %49 = vector.broadcast %cst_37 : f32 to vector<8x2xf32>
    %50 = arith.mulf %49, %46 : vector<8x2xf32>
    %51 = arith.select %48, %46, %50 : vector<8x2xi1>, vector<8x2xf32>
    %c0_38 = arith.constant 0 : index
    %c0_39 = arith.constant 0 : index
    %52 = vector.load %arg14[%c0_38, %c0_39] : memref<8x2xf32, #tpu.memory_space<vmem>>, vector<8x2xf32>
    tpu.vector_store %arg14[%c0_38, %c0_39], %51 {strides = array<i32>} : memref<8x2xf32, #tpu.memory_space<vmem>>, vector<8x2xf32>,
    return
  }
  func.func @transform_0(%arg0: i32) -> (i32, i32) {
    %c0_i32 = arith.constant 0 : i32
    %c0_i32_0 = arith.constant 0 : i32
    return %arg0, %c0_i32 : i32, i32
  }
  func.func @transform_1(%arg0: i32) -> (i32, i32) {
    %c0_i32 = arith.constant 0 : i32
    %c0_i32_0 = arith.constant 0 : i32
    return %arg0, %c0_i32 : i32, i32
  }
  func.func @transform_2(%arg0: i32) -> (i32, i32) {
    %c0_i32 = arith.constant 0 : i32
    %c0_i32_0 = arith.constant 0 : i32
    return %arg0, %c0_i32 : i32, i32
  }
  func.func @transform_3(%arg0: i32) -> (i32, i32) {
    %c0_i32 = arith.constant 0 : i32
    %c0_i32_0 = arith.constant 0 : i32
    %c0_i32_1 = arith.constant 0 : i32
    return %c0_i32, %c0_i32_0 : i32, i32
  }
  func.func @transform_4(%arg0: i32) -> (i32, i32) {
    %c0_i32 = arith.constant 0 : i32
    %c0_i32_0 = arith.constant 0 : i32
    %c0_i32_1 = arith.constant 0 : i32
    return %c0_i32, %c0_i32_0 : i32, i32
  }
  func.func @transform_5(%arg0: i32) -> (i32, i32) {
    %c0_i32 = arith.constant 0 : i32
    %c0_i32_0 = arith.constant 0 : i32
    %c0_i32_1 = arith.constant 0 : i32
    return %c0_i32, %c0_i32_0 : i32, i32
  }
  func.func @transform_6(%arg0: i32) -> (i32, i32) {
    %c0_i32 = arith.constant 0 : i32
    %c0_i32_0 = arith.constant 0 : i32
    %c0_i32_1 = arith.constant 0 : i32
    return %c0_i32, %c0_i32_0 : i32, i32
  }
  func.func @transform_7(%arg0: i32) -> (i32, i32) {
    %c0_i32 = arith.constant 0 : i32
    %c0_i32_0 = arith.constant 0 : i32
    %c0_i32_1 = arith.constant 0 : i32
    return %c0_i32, %c0_i32_0 : i32, i32
  }
  func.func @transform_8(%arg0: i32) -> (i32, i32) {
    %c0_i32 = arith.constant 0 : i32
    %c0_i32_0 = arith.constant 0 : i32
    %c0_i32_1 = arith.constant 0 : i32
    return %c0_i32, %c0_i32_0 : i32, i32
  }
  func.func @transform_9(%arg0: i32) -> (i32, i32) {
    %c0_i32 = arith.constant 0 : i32
    %c0_i32_0 = arith.constant 0 : i32
    %c0_i32_1 = arith.constant 0 : i32
    return %c0_i32, %c0_i32_0 : i32, i32
  }
  func.func @transform_10(%arg0: i32) -> (i32, i32) {
    %c0_i32 = arith.constant 0 : i32
    %c0_i32_0 = arith.constant 0 : i32
    %c0_i32_1 = arith.constant 0 : i32
    return %c0_i32, %c0_i32_0 : i32, i32
  }
  func.func @transform_11(%arg0: i32) -> (i32, i32) {
    %c0_i32 = arith.constant 0 : i32
    %c0_i32_0 = arith.constant 0 : i32
    %c0_i32_1 = arith.constant 0 : i32
    return %c0_i32, %c0_i32_0 : i32, i32
  }
  func.func @transform_12(%arg0: i32) -> (i32, i32) {
    %c0_i32 = arith.constant 0 : i32
    %c0_i32_0 = arith.constant 0 : i32
    %c0_i32_1 = arith.constant 0 : i32
    return %c0_i32, %c0_i32_0 : i32, i32
  }
  func.func @transform_13(%arg0: i32) -> (i32, i32) {
    %c0_i32 = arith.constant 0 : i32
    %c0_i32_0 = arith.constant 0 : i32
    return %arg0, %c0_i32 : i32, i32
  }
}

</mosaic_0001>

<llo_original>
// kernel: tpu_custom_call.1
$region0: #{tpu_custom_call.1}
  #allocation0 [shape = 'u32[]', space=smem, size = 0x4, offset = 0x4, fixed_abs, tag = 'smem constant byte address 0x4 - core index']
  #allocation1 [shape = 'u32[144,128]{1,0:T(1,128)}', space=vmem, size = 0x12000, scoped, tag = 'internal scratch']
  %s0 = inlined_call_operand.vmem [shape: f32[8,5], index: 0, kind: input, shape index: {}]
  %s1 = inlined_call_operand.hbm [shape: f32[8,7], index: 1, kind: input, shape index: {}]
  %s2 = inlined_call_operand.vmem [shape: f32[8,4], index: 2, kind: input, shape index: {}]
  %s3 = inlined_call_operand.hbm [shape: f32[5,32], index: 3, kind: input, shape index: {}]
  %s4 = inlined_call_operand.hbm [shape: f32[7,32], index: 4, kind: input, shape index: {}]
  %s5 = inlined_call_operand.vmem [shape: f32[4,32], index: 5, kind: input, shape index: {}]
  %s6 = inlined_call_operand.hbm [shape: f32[1,32], index: 6, kind: input, shape index: {}]
  %s7 = inlined_call_operand.vmem [shape: bf16[32,128], index: 7, kind: input, shape index: {}]
  %s8 = inlined_call_operand.hbm [shape: f32[1,128], index: 8, kind: input, shape index: {}]
  %s9 = inlined_call_operand.vmem [shape: bf16[128,256], index: 9, kind: input, shape index: {}]
  %s10 = inlined_call_operand.vmem [shape: f32[1,256], index: 10, kind: input, shape index: {}]
  %s11 = inlined_call_operand.vmem [shape: bf16[256,2], index: 11, kind: input, shape index: {}]
  %s12 = inlined_call_operand.vmem [shape: f32[1,2], index: 12, kind: input, shape index: {}]
  %s13 = inlined_call_operand.vmem [shape: f32[8,2], index: 13, kind: output, shape index: {}]
  %s14 = sld [smem:[#allocation0]]
  $region82: #{tpu_custom_call.1} parent=0
    _
  %s16 = ssub.s32 1, %s14
  %s17 = scalar_select 0, %s16, %s14
  $region1: #{tpu_custom_call.1} parent=0
    #allocation2 [shape = 'u8[4096]{0}', space=vmem, size = 0x1000, scoped, tag = 'input window, operand 1, single buffered']
    #allocation3 [shape = 's32[1]{0}', space=sflag, size = 0x4, scoped, tag = 'scoped memory for tpu_custom_call.1']
    #allocation4 [shape = 'u8[4096]{0}', space=vmem, size = 0x1000, scoped, tag = 'input window, operand 3, single buffered']
    #allocation5 [shape = 's32[1]{0}', space=sflag, size = 0x4, scoped, tag = 'scoped memory for tpu_custom_call.1']
    #allocation6 [shape = 'u8[4096]{0}', space=vmem, size = 0x1000, scoped, tag = 'input window, operand 4, single buffered']
    #allocation7 [shape = 'u8[512]{0}', space=vmem, size = 0x400, scoped, tag = 'input window, operand 6, single buffered']
    #allocation8 [shape = 's32[1]{0}', space=sflag, size = 0x4, scoped, tag = 'scoped memory for tpu_custom_call.1']
    #allocation9 [shape = 'u8[512]{0}', space=vmem, size = 0x400, scoped, tag = 'input window, operand 8, single buffered']
    %18 = vsyncpa [#allocation3], 0
    %19 = vsyncpa [#allocation5], 0
    %20 = vsyncpa [#allocation8], 0
    // Predicated region
    $region2: #{tpu_custom_call.1} parent=1 // pred_check
      _
    $region3: #{tpu_custom_call.1} parent=1 // pred_check_branch
      %22 = sbr.rel (0) target = $region5
    $region4: #{tpu_custom_call.1} parent=1 // pred_region
      _
    $region5: #{tpu_custom_call.1} parent=1 // pred_fallthru
      _
    // Predicated region
    $region6: #{tpu_custom_call.1} parent=1 // pred_check
      _
    $region7: #{tpu_custom_call.1} parent=1 // pred_check_branch
      %24 = sbr.rel (0) target = $region9
    $region8: #{tpu_custom_call.1} parent=1 // pred_region
      %s26 = ssub.s32 128, 128
      %27 = vsyncadd [#allocation3], %s26
      %s29 = sshll.u32 [#allocation2], 4
      %s30 = int_to_ptr.vmem [resolvable:$true] %s29
      %32 = dma.hbm_to_vmem [thread:$0]  %s1, 128, %s30, [#allocation3]
    $region9: #{tpu_custom_call.1} parent=1 // pred_fallthru
      _
    // Predicated region
    $region10: #{tpu_custom_call.1} parent=1 // pred_check
      _
    $region11: #{tpu_custom_call.1} parent=1 // pred_check_branch
      %34 = sbr.rel (0) target = $region13
    $region12: #{tpu_custom_call.1} parent=1 // pred_region
      _
    $region13: #{tpu_custom_call.1} parent=1 // pred_fallthru
      _
    // Predicated region
    $region14: #{tpu_custom_call.1} parent=1 // pred_check
      _
    $region15: #{tpu_custom_call.1} parent=1 // pred_check_branch
      %36 = sbr.rel (0) target = $region17
    $region16: #{tpu_custom_call.1} parent=1 // pred_region
      %s38 = ssub.s32 128, 128
      %39 = vsyncadd [#allocation5], %s38
      %s41 = sshll.u32 [#allocation4], 4
      %s42 = int_to_ptr.vmem [resolvable:$true] %s41
      %44 = dma.hbm_to_vmem [thread:$0]  %s3, 128, %s42, [#allocation5]
    $region17: #{tpu_custom_call.1} parent=1 // pred_fallthru
      _
    // Predicated region
    $region18: #{tpu_custom_call.1} parent=1 // pred_check
      _
    $region19: #{tpu_custom_call.1} parent=1 // pred_check_branch
      %46 = sbr.rel (0) target = $region21
    $region20: #{tpu_custom_call.1} parent=1 // pred_region
      %s48 = ssub.s32 128, 128
      %49 = vsyncadd [#allocation5], %s48
      %s51 = sshll.u32 [#allocation6], 4
      %s52 = int_to_ptr.vmem [resolvable:$true] %s51
      %54 = dma.hbm_to_vmem [thread:$0]  %s4, 128, %s52, [#allocation5]
    $region21: #{tpu_custom_call.1} parent=1 // pred_fallthru
      _
    // Predicated region
    $region22: #{tpu_custom_call.1} parent=1 // pred_check
      _
    $region23: #{tpu_custom_call.1} parent=1 // pred_check_branch
      %56 = sbr.rel (0) target = $region25
    $region24: #{tpu_custom_call.1} parent=1 // pred_region
      _
    $region25: #{tpu_custom_call.1} parent=1 // pred_fallthru
      _
    // Predicated region
    $region26: #{tpu_custom_call.1} parent=1 // pred_check
      _
    $region27: #{tpu_custom_call.1} parent=1 // pred_check_branch
      %58 = sbr.rel (0) target = $region29
    $region28: #{tpu_custom_call.1} parent=1 // pred_region
      %s60 = ssub.s32 16, 16
      %61 = vsyncadd [#allocation8], %s60
      %s63 = sshll.u32 [#allocation7], 4
      %s64 = int_to_ptr.vmem [resolvable:$true] %s63
      %66 = dma.hbm_to_vmem [thread:$0]  %s6, 16, %s64, [#allocation8]
    $region29: #{tpu_custom_call.1} parent=1 // pred_fallthru
      _
    // Predicated region
    $region30: #{tpu_custom_call.1} parent=1 // pred_check
      _
    $region31: #{tpu_custom_call.1} parent=1 // pred_check_branch
      %68 = sbr.rel (0) target = $region33
    $region32: #{tpu_custom_call.1} parent=1 // pred_region
      _
    $region33: #{tpu_custom_call.1} parent=1 // pred_fallthru
      _
    // Predicated region
    $region34: #{tpu_custom_call.1} parent=1 // pred_check
      _
    $region35: #{tpu_custom_call.1} parent=1 // pred_check_branch
      %70 = sbr.rel (0) target = $region37
    $region36: #{tpu_custom_call.1} parent=1 // pred_region
      %s72 = ssub.s32 16, 16
      %73 = vsyncadd [#allocation8], %s72
      %s75 = sshll.u32 [#allocation9], 4
      %s76 = int_to_ptr.vmem [resolvable:$true] %s75
      %78 = dma.hbm_to_vmem [thread:$0]  %s8, 16, %s76, [#allocation8]
    $region37: #{tpu_custom_call.1} parent=1 // pred_fallthru
      _
    // Predicated region
    $region38: #{tpu_custom_call.1} parent=1 // pred_check
      _
    $region39: #{tpu_custom_call.1} parent=1 // pred_check_branch
      %80 = sbr.rel (0) target = $region41
    $region40: #{tpu_custom_call.1} parent=1 // pred_region
      _
    $region41: #{tpu_custom_call.1} parent=1 // pred_fallthru
      _
    // Predicated region
    $region42: #{tpu_custom_call.1} parent=1 // pred_check
      _
    $region43: #{tpu_custom_call.1} parent=1 // pred_check_branch
      %82 = sbr.rel (0) target = $region45
    $region44: #{tpu_custom_call.1} parent=1 // pred_region
      _
    $region45: #{tpu_custom_call.1} parent=1 // pred_fallthru
      _
    // Predicated region
    $region46: #{tpu_custom_call.1} parent=1 // pred_check
      _
    $region47: #{tpu_custom_call.1} parent=1 // pred_check_branch
      %84 = sbr.rel (0) target = $region49
    $region48: #{tpu_custom_call.1} parent=1 // pred_region
      _
    $region49: #{tpu_custom_call.1} parent=1 // pred_fallthru
      _
    // Predicated region
    $region50: #{tpu_custom_call.1} parent=1 // pred_check
      _
    $region51: #{tpu_custom_call.1} parent=1 // pred_check_branch
      %86 = sbr.rel (0) target = $region53
    $region52: #{tpu_custom_call.1} parent=1 // pred_region
      _
    $region53: #{tpu_custom_call.1} parent=1 // pred_fallthru
      _
    // Predicated region
    $region54: #{tpu_custom_call.1} parent=1 // pred_check
      _
    $region55: #{tpu_custom_call.1} parent=1 // pred_check_branch
      %88 = sbr.rel (0) target = $region57
    $region56: #{tpu_custom_call.1} parent=1 // pred_region
      %89 = dma.done [#allocation3], 128
    $region57: #{tpu_custom_call.1} parent=1 // pred_fallthru
      _
    // Predicated region
    $region58: #{tpu_custom_call.1} parent=1 // pred_check
      _
    $region59: #{tpu_custom_call.1} parent=1 // pred_check_branch
      %91 = sbr.rel (0) target = $region61
    $region60: #{tpu_custom_call.1} parent=1 // pred_region
      %92 = dma.done [#allocation5], 128
    $region61: #{tpu_custom_call.1} parent=1 // pred_fallthru
      _
    // Predicated region
    $region62: #{tpu_custom_call.1} parent=1 // pred_check
      _
    $region63: #{tpu_custom_call.1} parent=1 // pred_check_branch
      %94 = sbr.rel (0) target = $region65
    $region64: #{tpu_custom_call.1} parent=1 // pred_region
      %95 = dma.done [#allocation5], 128
    $region65: #{tpu_custom_call.1} parent=1 // pred_fallthru
      _
    // Predicated region
    $region66: #{tpu_custom_call.1} parent=1 // pred_check
      _
    $region67: #{tpu_custom_call.1} parent=1 // pred_check_branch
      %97 = sbr.rel (0) target = $region69
    $region68: #{tpu_custom_call.1} parent=1 // pred_region
      %98 = dma.done [#allocation8], 16
    $region69: #{tpu_custom_call.1} parent=1 // pred_fallthru
      _
    // Predicated region
    $region70: #{tpu_custom_call.1} parent=1 // pred_check
      _
    $region71: #{tpu_custom_call.1} parent=1 // pred_check_branch
      %100 = sbr.rel (0) target = $region73
    $region72: #{tpu_custom_call.1} parent=1 // pred_region
      %101 = dma.done [#allocation8], 16
    $region73: #{tpu_custom_call.1} parent=1 // pred_fallthru
      _
    %v103 = vld [vmem:[%s0] sm:$0xff]
    %v104 = vld [vmem:[#allocation4] sm:$0x1f]
    %v105 = vld [vmem:[#allocation2] sm:$0xff]
    %v106 = vld [vmem:[#allocation6] sm:$0x7f]
    %vm107 = vcmask 56320
    %v109 = vsel %vm107, %v105, 0
    %vm111 = vcmask 1046528
    %v113 = vsel %vm111, %v106, 0
    %115 = vmatprep.subr.mxu0 0.0
    %116 = vmatpush1.msra.mxu0 0.0
    %117 = vmatprep.subr.mxu0 0.0
    %118 = vmatpush1.msra.mxu0 0.0
    %119 = vmatprep.subr.mxu0 0.0
    %120 = vmatpush1.msra.mxu0 0.0
    %121 = vmatprep.subr.mxu0 0.0
    %122 = vmatpush1.msra.mxu0 0.0
    %123 = vmatprep.subr.mxu0 0.0
    %124 = vmatpush1.msra.mxu0 0.0
    %125 = vmatprep.subr.mxu0 0.0
    %126 = vmatpush1.msra.mxu0 0.0
    %127 = vmatprep.subr.mxu0 0.0
    %128 = vmatpush1.msra.mxu0 0.0
    %129 = vmatprep.subr.mxu0 0.0
    %130 = vmatpush1.msra.mxu0 0.0
    %131 = vmatprep.subr.mxu0 0.0
    %132 = vmatpush1.msra.mxu0 0.0
    %133 = vmatprep.subr.mxu0 0.0
    %134 = vmatpush1.msra.mxu0 0.0
    %135 = vmatprep.subr.mxu0 0.0
    %136 = vmatpush1.msra.mxu0 0.0
    %137 = vmatprep.subr.mxu0 0.0
    %138 = vmatpush1.msra.mxu0 0.0
    %139 = vmatprep.subr.mxu0 0.0
    %140 = vmatpush1.msra.mxu0 0.0
    %141 = vmatprep.subr.mxu0 0.0
    %142 = vmatpush1.msra.mxu0 0.0
    %143 = vmatprep.subr.mxu0 0.0
    %144 = vmatpush1.msra.mxu0 0.0
    %145 = vmatprep.subr.mxu0 0.0
    %146 = vmatpush1.msra.mxu0 %v113
    %147 = vmatprep.subr.mxu0 0.0
    %148 = vmatpush2.msra.mxu0 0.0
    %149 = vmatprep.subr.mxu0 0.0
    %150 = vmatpush2.msra.mxu0 0.0
    %151 = vmatprep.subr.mxu0 0.0
    %152 = vmatpush2.msra.mxu0 0.0
    %153 = vmatprep.subr.mxu0 0.0
    %154 = vmatpush2.msra.mxu0 0.0
    %155 = vmatprep.subr.mxu0 0.0
    %156 = vmatpush2.msra.mxu0 0.0
    %157 = vmatprep.subr.mxu0 0.0
    %158 = vmatpush2.msra.mxu0 0.0
    %159 = vmatprep.subr.mxu0 0.0
    %160 = vmatpush2.msra.mxu0 0.0
    %161 = vmatprep.subr.mxu0 0.0
    %162 = vmatpush2.msra.mxu0 0.0
    %163 = vmatprep.subr.mxu0 0.0
    %164 = vmatpush2.msra.mxu0 0.0
    %165 = vmatprep.subr.mxu0 0.0
    %166 = vmatpush2.msra.mxu0 0.0
    %167 = vmatprep.subr.mxu0 0.0
    %168 = vmatpush2.msra.mxu0 0.0
    %169 = vmatprep.subr.mxu0 0.0
    %170 = vmatpush2.msra.mxu0 0.0
    %171 = vmatprep.subr.mxu0 0.0
    %172 = vmatpush2.msra.mxu0 0.0
    %173 = vmatprep.subr.mxu0 0.0
    %174 = vmatpush2.msra.mxu0 0.0
    %175 = vmatprep.subr.mxu0 0.0
    %176 = vmatpush2.msra.mxu0 0.0
    %177 = vmatprep.subr.mxu0 0.0
    %178 = vmatpush2.msra.mxu0 0.0
    %179 = vmatprep.mubr.f32.mxu0 0.0
    %180 = vmatmul.mubr.f32.gmra.mxu0 %v109
    %v181 = vpop.f32.mrf.mxu0
    %v182 = vadd.f32 0.0, %v181
    %v183 = vpop.f32.mrf.mxu0
    %184 = vdwg.mxu0
    %vm185 = vcmask 39936
    %v187 = vsel %vm185, %v103, 0
    %vm189 = vcmask 1044480
    %v191 = vsel %vm189, %v104, 0
    %193 = vmatprep.subr.mxu0 0.0
    %194 = vmatpush1.msra.mxu0 0.0
    %195 = vmatprep.subr.mxu0 0.0
    %196 = vmatpush1.msra.mxu0 0.0
    %197 = vmatprep.subr.mxu0 0.0
    %198 = vmatpush1.msra.mxu0 0.0
    %199 = vmatprep.subr.mxu0 0.0
    %200 = vmatpush1.msra.mxu0 0.0
    %201 = vmatprep.subr.mxu0 0.0
    %202 = vmatpush1.msra.mxu0 0.0
    %203 = vmatprep.subr.mxu0 0.0
    %204 = vmatpush1.msra.mxu0 0.0
    %205 = vmatprep.subr.mxu0 0.0
    %206 = vmatpush1.msra.mxu0 0.0
    %207 = vmatprep.subr.mxu0 0.0
    %208 = vmatpush1.msra.mxu0 0.0
    %209 = vmatprep.subr.mxu0 0.0
    %210 = vmatpush1.msra.mxu0 0.0
    %211 = vmatprep.subr.mxu0 0.0
    %212 = vmatpush1.msra.mxu0 0.0
    %213 = vmatprep.subr.mxu0 0.0
    %214 = vmatpush1.msra.mxu0 0.0
    %215 = vmatprep.subr.mxu0 0.0
    %216 = vmatpush1.msra.mxu0 0.0
    %217 = vmatprep.subr.mxu0 0.0
    %218 = vmatpush1.msra.mxu0 0.0
    %219 = vmatprep.subr.mxu0 0.0
    %220 = vmatpush1.msra.mxu0 0.0
    %221 = vmatprep.subr.mxu0 0.0
    %222 = vmatpush1.msra.mxu0 0.0
    %223 = vmatprep.subr.mxu0 0.0
    %224 = vmatpush1.msra.mxu0 %v191
    %225 = vmatprep.subr.mxu0 0.0
    %226 = vmatpush2.msra.mxu0 0.0
    %227 = vmatprep.subr.mxu0 0.0
    %228 = vmatpush2.msra.mxu0 0.0
    %229 = vmatprep.subr.mxu0 0.0
    %230 = vmatpush2.msra.mxu0 0.0
    %231 = vmatprep.subr.mxu0 0.0
    %232 = vmatpush2.msra.mxu0 0.0
    %233 = vmatprep.subr.mxu0 0.0
    %234 = vmatpush2.msra.mxu0 0.0
    %235 = vmatprep.subr.mxu0 0.0
    %236 = vmatpush2.msra.mxu0 0.0
    %237 = vmatprep.subr.mxu0 0.0
    %238 = vmatpush2.msra.mxu0 0.0
    %239 = vmatprep.subr.mxu0 0.0
    %240 = vmatpush2.msra.mxu0 0.0
    %241 = vmatprep.subr.mxu0 0.0
    %242 = vmatpush2.msra.mxu0 0.0
    %243 = vmatprep.subr.mxu0 0.0
    %244 = vmatpush2.msra.mxu0 0.0
    %245 = vmatprep.subr.mxu0 0.0
    %246 = vmatpush2.msra.mxu0 0.0
    %247 = vmatprep.subr.mxu0 0.0
    %248 = vmatpush2.msra.mxu0 0.0
    %249 = vmatprep.subr.mxu0 0.0
    %250 = vmatpush2.msra.mxu0 0.0
    %251 = vmatprep.subr.mxu0 0.0
    %252 = vmatpush2.msra.mxu0 0.0
    %253 = vmatprep.subr.mxu0 0.0
    %254 = vmatpush2.msra.mxu0 0.0
    %255 = vmatprep.subr.mxu0 0.0
    %256 = vmatpush2.msra.mxu0 0.0
    %257 = vmatprep.mubr.f32.mxu0 0.0
    %258 = vmatmul.mubr.f32.gmra.mxu0 %v187
    %v259 = vpop.f32.mrf.mxu0
    %v260 = vadd.f32 %v182, %v259
    %v261 = vpop.f32.mrf.mxu0
    %262 = vdwg.mxu0
    %v263 = vld [vmem:[%s2] sm:$0xff]
    %v264 = vld [vmem:[%s5] sm:$0xf]
    %vm265 = vcmask 31744
    %v267 = vsel %vm265, %v263, 0
    %vm269 = vcmask 1043456
    %v271 = vsel %vm269, %v264, 0
    %273 = vmatprep.subr.mxu0 0.0
    %274 = vmatpush1.msra.mxu0 0.0
    %275 = vmatprep.subr.mxu0 0.0
    %276 = vmatpush1.msra.mxu0 0.0
    %277 = vmatprep.subr.mxu0 0.0
    %278 = vmatpush1.msra.mxu0 0.0
    %279 = vmatprep.subr.mxu0 0.0
    %280 = vmatpush1.msra.mxu0 0.0
    %281 = vmatprep.subr.mxu0 0.0
    %282 = vmatpush1.msra.mxu0 0.0
    %283 = vmatprep.subr.mxu0 0.0
    %284 = vmatpush1.msra.mxu0 0.0
    %285 = vmatprep.subr.mxu0 0.0
    %286 = vmatpush1.msra.mxu0 0.0
    %287 = vmatprep.subr.mxu0 0.0
    %288 = vmatpush1.msra.mxu0 0.0
    %289 = vmatprep.subr.mxu0 0.0
    %290 = vmatpush1.msra.mxu0 0.0
    %291 = vmatprep.subr.mxu0 0.0
    %292 = vmatpush1.msra.mxu0 0.0
    %293 = vmatprep.subr.mxu0 0.0
    %294 = vmatpush1.msra.mxu0 0.0
    %295 = vmatprep.subr.mxu0 0.0
    %296 = vmatpush1.msra.mxu0 0.0
    %297 = vmatprep.subr.mxu0 0.0
    %298 = vmatpush1.msra.mxu0 0.0
    %299 = vmatprep.subr.mxu0 0.0
    %300 = vmatpush1.msra.mxu0 0.0
    %301 = vmatprep.subr.mxu0 0.0
    %302 = vmatpush1.msra.mxu0 0.0
    %303 = vmatprep.subr.mxu0 0.0
    %304 = vmatpush1.msra.mxu0 %v271
    %305 = vmatprep.subr.mxu0 0.0
    %306 = vmatpush2.msra.mxu0 0.0
    %307 = vmatprep.subr.mxu0 0.0
    %308 = vmatpush2.msra.mxu0 0.0
    %309 = vmatprep.subr.mxu0 0.0
    %310 = vmatpush2.msra.mxu0 0.0
    %311 = vmatprep.subr.mxu0 0.0
    %312 = vmatpush2.msra.mxu0 0.0
    %313 = vmatprep.subr.mxu0 0.0
    %314 = vmatpush2.msra.mxu0 0.0
    %315 = vmatprep.subr.mxu0 0.0
    %316 = vmatpush2.msra.mxu0 0.0
    %317 = vmatprep.subr.mxu0 0.0
    %318 = vmatpush2.msra.mxu0 0.0
    %319 = vmatprep.subr.mxu0 0.0
    %320 = vmatpush2.msra.mxu0 0.0
    %321 = vmatprep.subr.mxu0 0.0
    %322 = vmatpush2.msra.mxu0 0.0
    %323 = vmatprep.subr.mxu0 0.0
    %324 = vmatpush2.msra.mxu0 0.0
    %325 = vmatprep.subr.mxu0 0.0
    %326 = vmatpush2.msra.mxu0 0.0
    %327 = vmatprep.subr.mxu0 0.0
    %328 = vmatpush2.msra.mxu0 0.0
    %329 = vmatprep.subr.mxu0 0.0
    %330 = vmatpush2.msra.mxu0 0.0
    %331 = vmatprep.subr.mxu0 0.0
    %332 = vmatpush2.msra.mxu0 0.0
    %333 = vmatprep.subr.mxu0 0.0
    %334 = vmatpush2.msra.mxu0 0.0
    %335 = vmatprep.subr.mxu0 0.0
    %336 = vmatpush2.msra.mxu0 0.0
    %337 = vmatprep.mubr.f32.mxu0 0.0
    %338 = vmatmul.mubr.f32.gmra.mxu0 %v267
    %v339 = vpop.f32.mrf.mxu0
    %v340 = vadd.f32 0.0, %v339
    %v341 = vpop.f32.mrf.mxu0
    %342 = vdwg.mxu0
    %v343 = vadd.f32 %v260, %v340
    %v344 = vld [vmem:[#allocation7] sm:$0x1]
    %v346 = vlaneseq
    %v347 = vshrl.u32 %v346, 7
    %v348 = vsub.s32 0, %v347
    %v349 = vrot.slane %v344, %v348
    %v351 = vadd.f32 %v343, %v349
    %vm352 = vcmp.gt.f32.partialorder %v351, 0.0
    %v353 = vmul.f32 %v351, 0.01
    %v354 = vsel %vm352, %v351, %v353
    %v355 = vpack.c.bf16 %v354, %v354
    %v356 = vld [vmem:[%s7] sm:$0xf]
    %v357 = vld [vmem:[%s7 + $0x4] sm:$0xf]
    %v358 = vld [vmem:[%s7 + $0x8] sm:$0xf]
    %v359 = vld [vmem:[%s7 + $0xc] sm:$0xf]
    %v360 = vld [vmem:[#allocation9] sm:$0x1]
    %v362 = vlaneseq
    %v363 = vshrl.u32 %v362, 7
    %v364 = vsub.s32 0, %v363
    %v365 = vrot.slane %v360, %v364
    %v371 = vunpack.c.l.b16 %v356
    %v372 = vunpack.c.l.b16 %v357
    %v373 = vunpack.c.l.b16 %v358
    %v374 = vunpack.c.l.b16 %v359
    %v375 = vpack.c.b16 %v372, %v371
    %v376 = vpack.c.b16 %v374, %v373
    %vm379 = vcmask 261120
    %v381 = vsel %vm379, %v355, 0
    %383 = vmatprep.subr.bf16.mxu0 0
    %384 = vmatpush1.bf16.msra.mxu0 0
    %385 = vmatprep.subr.bf16.mxu0 0
    %386 = vmatpush1.bf16.msra.mxu0 0
    %387 = vmatprep.subr.bf16.mxu0 0
    %388 = vmatpush1.bf16.msra.mxu0 0
    %389 = vmatprep.subr.bf16.mxu0 0
    %390 = vmatpush1.bf16.msra.mxu0 0
    %391 = vmatprep.subr.bf16.mxu0 0
    %392 = vmatpush1.bf16.msra.mxu0 0
    %393 = vmatprep.subr.bf16.mxu0 0
    %394 = vmatpush1.bf16.msra.mxu0 0
    %395 = vmatprep.subr.bf16.mxu0 0
    %396 = vmatpush1.bf16.msra.mxu0 %v376
    %397 = vmatprep.subr.bf16.mxu0 0
    %398 = vmatpush1.bf16.msra.mxu0 %v375
    %399 = vmatprep.subr.bf16.mxu0 0
    %400 = vmatpush2.bf16.msra.mxu0 0
    %401 = vmatprep.subr.bf16.mxu0 0
    %402 = vmatpush2.bf16.msra.mxu0 0
    %403 = vmatprep.subr.bf16.mxu0 0
    %404 = vmatpush2.bf16.msra.mxu0 0
    %405 = vmatprep.subr.bf16.mxu0 0
    %406 = vmatpush2.bf16.msra.mxu0 0
    %407 = vmatprep.subr.bf16.mxu0 0
    %408 = vmatpush2.bf16.msra.mxu0 0
    %409 = vmatprep.subr.bf16.mxu0 0
    %410 = vmatpush2.bf16.msra.mxu0 0
    %411 = vmatprep.subr.bf16.mxu0 0
    %412 = vmatpush2.bf16.msra.mxu0 0
    %413 = vmatprep.subr.bf16.mxu0 0
    %414 = vmatpush2.bf16.msra.mxu0 0
    %415 = vmatprep.mubr.bf16.mxu0 0
    %416 = vmatmul.mubr.bf16.gmra.mxu0 %v381
    %v417 = vpop.f32.mrf.mxu0
    %v418 = vadd.f32 %v365, %v417
    %v419 = vpop.f32.mrf.mxu0
    %v420 = vpop.f32.mrf.mxu0
    %v421 = vpop.f32.mrf.mxu0
    %422 = vdwg.mxu0
    %vm423 = vcmp.gt.f32.partialorder %v418, 0.0
    %v424 = vmul.f32 %v418, 0.01
    %v425 = vsel %vm423, %v418, %v424
    %v426 = vpack.c.bf16 %v425, %v425
    %v427 = vld [vmem:[%s9] sm:$0xff]
    %v428 = vld [vmem:[%s9 + $0x8] sm:$0xff]
    %v429 = vld [vmem:[%s9 + $0x10] sm:$0xff]
    %v430 = vld [vmem:[%s9 + $0x18] sm:$0xff]
    %v431 = vld [vmem:[%s9 + $0x20] sm:$0xff]
    %v432 = vld [vmem:[%s9 + $0x28] sm:$0xff]
    %v433 = vld [vmem:[%s9 + $0x30] sm:$0xff]
    %v434 = vld [vmem:[%s9 + $0x38] sm:$0xff]
    %v435 = vld [vmem:[%s9 + $0x40] sm:$0xff]
    %v436 = vld [vmem:[%s9 + $0x48] sm:$0xff]
    %v437 = vld [vmem:[%s9 + $0x50] sm:$0xff]
    %v438 = vld [vmem:[%s9 + $0x58] sm:$0xff]
    %v439 = vld [vmem:[%s9 + $0x60] sm:$0xff]
    %v440 = vld [vmem:[%s9 + $0x68] sm:$0xff]
    %v441 = vld [vmem:[%s9 + $0x70] sm:$0xff]
    %v442 = vld [vmem:[%s9 + $0x78] sm:$0xff]
    %v443 = vld [vmem:[%s10] sm:$0x3]
    %v445 = vlaneseq
    %v446 = vshrl.u32 %v445, 7
    %v447 = vsub.s32 0, %v446
    %v448 = vrot.slane %v443, %v447
    %v449 = vlaneseq
    %v450 = vshrl.u32 %v449, 7
    %v451 = vsub.s32 1, %v450
    %v452 = vrot.slane %v443, %v451
    %v471 = vunpack.c.l.b16 %v427
    %v472 = vunpack.c.h.b16 %v427
    %v473 = vunpack.c.l.b16 %v428
    %v474 = vunpack.c.h.b16 %v428
    %v475 = vunpack.c.l.b16 %v429
    %v476 = vunpack.c.h.b16 %v429
    %v477 = vunpack.c.l.b16 %v430
    %v478 = vunpack.c.h.b16 %v430
    %v479 = vunpack.c.l.b16 %v431
    %v480 = vunpack.c.h.b16 %v431
    %v481 = vunpack.c.l.b16 %v432
    %v482 = vunpack.c.h.b16 %v432
    %v483 = vunpack.c.l.b16 %v433
    %v484 = vunpack.c.h.b16 %v433
    %v485 = vunpack.c.l.b16 %v434
    %v486 = vunpack.c.h.b16 %v434
    %v487 = vunpack.c.l.b16 %v435
    %v488 = vunpack.c.h.b16 %v435
    %v489 = vunpack.c.l.b16 %v436
    %v490 = vunpack.c.h.b16 %v436
    %v491 = vunpack.c.l.b16 %v437
    %v492 = vunpack.c.h.b16 %v437
    %v493 = vunpack.c.l.b16 %v438
    %v494 = vunpack.c.h.b16 %v438
    %v495 = vunpack.c.l.b16 %v439
    %v496 = vunpack.c.h.b16 %v439
    %v497 = vunpack.c.l.b16 %v440
    %v498 = vunpack.c.h.b16 %v440
    %v499 = vunpack.c.l.b16 %v441
    %v500 = vunpack.c.h.b16 %v441
    %v501 = vunpack.c.l.b16 %v442
    %v502 = vunpack.c.h.b16 %v442
    %v503 = vpack.c.b16 %v473, %v471
    %v504 = vpack.c.b16 %v474, %v472
    %v505 = vpack.c.b16 %v477, %v475
    %v506 = vpack.c.b16 %v478, %v476
    %v507 = vpack.c.b16 %v481, %v479
    %v508 = vpack.c.b16 %v482, %v480
    %v509 = vpack.c.b16 %v485, %v483
    %v510 = vpack.c.b16 %v486, %v484
    %v511 = vpack.c.b16 %v489, %v487
    %v512 = vpack.c.b16 %v490, %v488
    %v513 = vpack.c.b16 %v493, %v491
    %v514 = vpack.c.b16 %v494, %v492
    %v515 = vpack.c.b16 %v497, %v495
    %v516 = vpack.c.b16 %v498, %v496
    %v517 = vpack.c.b16 %v501, %v499
    %v518 = vpack.c.b16 %v502, %v500
    %535 = vmatprep.subr.bf16.mxu0 %v518
    %536 = vmatpush1.bf16.msra.mxu0 %v517
    %537 = vmatprep.subr.bf16.mxu0 %v516
    %538 = vmatpush1.bf16.msra.mxu0 %v515
    %539 = vmatprep.subr.bf16.mxu0 %v514
    %540 = vmatpush1.bf16.msra.mxu0 %v513
    %541 = vmatprep.subr.bf16.mxu0 %v512
    %542 = vmatpush1.bf16.msra.mxu0 %v511
    %543 = vmatprep.subr.bf16.mxu0 %v510
    %544 = vmatpush1.bf16.msra.mxu0 %v509
    %545 = vmatprep.subr.bf16.mxu0 %v508
    %546 = vmatpush1.bf16.msra.mxu0 %v507
    %547 = vmatprep.subr.bf16.mxu0 %v506
    %548 = vmatpush1.bf16.msra.mxu0 %v505
    %549 = vmatprep.subr.bf16.mxu0 %v504
    %550 = vmatpush1.bf16.msra.mxu0 %v503
    %551 = vmatprep.subr.bf16.mxu0 0
    %552 = vmatpush2.bf16.msra.mxu0 0
    %553 = vmatprep.subr.bf16.mxu0 0
    %554 = vmatpush2.bf16.msra.mxu0 0
    %555 = vmatprep.subr.bf16.mxu0 0
    %556 = vmatpush2.bf16.msra.mxu0 0
    %557 = vmatprep.subr.bf16.mxu0 0
    %558 = vmatpush2.bf16.msra.mxu0 0
    %559 = vmatprep.subr.bf16.mxu0 0
    %560 = vmatpush2.bf16.msra.mxu0 0
    %561 = vmatprep.subr.bf16.mxu0 0
    %562 = vmatpush2.bf16.msra.mxu0 0
    %563 = vmatprep.subr.bf16.mxu0 0
    %564 = vmatpush2.bf16.msra.mxu0 0
    %565 = vmatprep.subr.bf16.mxu0 0
    %566 = vmatpush2.bf16.msra.mxu0 0
    %567 = vmatprep.mubr.bf16.mxu0 0
    %568 = vmatmul.mubr.bf16.gmra.mxu0 %v426
    %v569 = vpop.f32.mrf.mxu0
    %v570 = vadd.f32 %v448, %v569
    %v571 = vpop.f32.mrf.mxu0
    %v572 = vadd.f32 %v452, %v571
    %v573 = vpop.f32.mrf.mxu0
    %v574 = vpop.f32.mrf.mxu0
    %575 = vdwg.mxu0
    %vm576 = vcmp.gt.f32.partialorder %v570, 0.0
    %vm577 = vcmp.gt.f32.partialorder %v572, 0.0
    %v578 = vmul.f32 %v570, 0.01
    %v579 = vmul.f32 %v572, 0.01
    %v580 = vsel %vm576, %v570, %v578
    %v581 = vsel %vm577, %v572, %v579
    %v582 = vpack.c.bf16 %v580, %v580
    %v583 = vpack.c.bf16 %v581, %v581
    %v584 = vld [vmem:[%s11] sm:$0xf]
    %v585 = vld [vmem:[%s11 + $0x4] sm:$0xf]
    %v586 = vld [vmem:[%s11 + $0x8] sm:$0xf]
    %v587 = vld [vmem:[%s11 + $0xc] sm:$0xf]
    %v588 = vld [vmem:[%s11 + $0x10] sm:$0xf]
    %v589 = vld [vmem:[%s11 + $0x14] sm:$0xf]
    %v590 = vld [vmem:[%s11 + $0x18] sm:$0xf]
    %v591 = vld [vmem:[%s11 + $0x1c] sm:$0xf]
    %v592 = vld [vmem:[%s11 + $0x20] sm:$0xf]
    %v593 = vld [vmem:[%s11 + $0x24] sm:$0xf]
    %v594 = vld [vmem:[%s11 + $0x28] sm:$0xf]
    %v595 = vld [vmem:[%s11 + $0x2c] sm:$0xf]
    %v596 = vld [vmem:[%s11 + $0x30] sm:$0xf]
    %v597 = vld [vmem:[%s11 + $0x34] sm:$0xf]
    %v598 = vld [vmem:[%s11 + $0x38] sm:$0xf]
    %v599 = vld [vmem:[%s11 + $0x3c] sm:$0xf]
    %v600 = vld [vmem:[%s11 + $0x40] sm:$0xf]
    %v601 = vld [vmem:[%s11 + $0x44] sm:$0xf]
    %v602 = vld [vmem:[%s11 + $0x48] sm:$0xf]
    %v603 = vld [vmem:[%s11 + $0x4c] sm:$0xf]
    %v604 = vld [vmem:[%s11 + $0x50] sm:$0xf]
    %v605 = vld [vmem:[%s11 + $0x54] sm:$0xf]
    %v606 = vld [vmem:[%s11 + $0x58] sm:$0xf]
    %v607 = vld [vmem:[%s11 + $0x5c] sm:$0xf]
    %v608 = vld [vmem:[%s11 + $0x60] sm:$0xf]
    %v609 = vld [vmem:[%s11 + $0x64] sm:$0xf]
    %v610 = vld [vmem:[%s11 + $0x68] sm:$0xf]
    %v611 = vld [vmem:[%s11 + $0x6c] sm:$0xf]
    %v612 = vld [vmem:[%s11 + $0x70] sm:$0xf]
    %v613 = vld [vmem:[%s11 + $0x74] sm:$0xf]
    %v614 = vld [vmem:[%s11 + $0x78] sm:$0xf]
    %v615 = vld [vmem:[%s11 + $0x7c] sm:$0xf]
    %v616 = vld [vmem:[%s12] sm:$0x1]
    %v618 = vlaneseq
    %v619 = vshrl.u32 %v618, 7
    %v620 = vsub.s32 0, %v619
    %v621 = vrot.slane %v616, %v620
    %v655 = vunpack.c.l.b16 %v584
    %v656 = vunpack.c.l.b16 %v585
    %v657 = vunpack.c.l.b16 %v586
    %v658 = vunpack.c.l.b16 %v587
    %v659 = vunpack.c.l.b16 %v588
    %v660 = vunpack.c.l.b16 %v589
    %v661 = vunpack.c.l.b16 %v590
    %v662 = vunpack.c.l.b16 %v591
    %v663 = vunpack.c.l.b16 %v592
    %v664 = vunpack.c.l.b16 %v593
    %v665 = vunpack.c.l.b16 %v594
    %v666 = vunpack.c.l.b16 %v595
    %v667 = vunpack.c.l.b16 %v596
    %v668 = vunpack.c.l.b16 %v597
    %v669 = vunpack.c.l.b16 %v598
    %v670 = vunpack.c.l.b16 %v599
    %v671 = vunpack.c.l.b16 %v600
    %v672 = vunpack.c.l.b16 %v601
    %v673 = vunpack.c.l.b16 %v602
    %v674 = vunpack.c.l.b16 %v603
    %v675 = vunpack.c.l.b16 %v604
    %v676 = vunpack.c.l.b16 %v605
    %v677 = vunpack.c.l.b16 %v606
    %v678 = vunpack.c.l.b16 %v607
    %v679 = vunpack.c.l.b16 %v608
    %v680 = vunpack.c.l.b16 %v609
    %v681 = vunpack.c.l.b16 %v610
    %v682 = vunpack.c.l.b16 %v611
    %v683 = vunpack.c.l.b16 %v612
    %v684 = vunpack.c.l.b16 %v613
    %v685 = vunpack.c.l.b16 %v614
    %v686 = vunpack.c.l.b16 %v615
    %v687 = vpack.c.b16 %v656, %v655
    %v688 = vpack.c.b16 %v658, %v657
    %v689 = vpack.c.b16 %v660, %v659
    %v690 = vpack.c.b16 %v662, %v661
    %v691 = vpack.c.b16 %v664, %v663
    %v692 = vpack.c.b16 %v666, %v665
    %v693 = vpack.c.b16 %v668, %v667
    %v694 = vpack.c.b16 %v670, %v669
    %v695 = vpack.c.b16 %v672, %v671
    %v696 = vpack.c.b16 %v674, %v673
    %v697 = vpack.c.b16 %v676, %v675
    %v698 = vpack.c.b16 %v678, %v677
    %v699 = vpack.c.b16 %v680, %v679
    %v700 = vpack.c.b16 %v682, %v681
    %v701 = vpack.c.b16 %v684, %v683
    %v702 = vpack.c.b16 %v686, %v685
    %719 = vmatprep.subr.bf16.mxu0 0
    %720 = vmatpush1.bf16.msra.mxu0 %v694
    %721 = vmatprep.subr.bf16.mxu0 0
    %722 = vmatpush1.bf16.msra.mxu0 %v693
    %723 = vmatprep.subr.bf16.mxu0 0
    %724 = vmatpush1.bf16.msra.mxu0 %v692
    %725 = vmatprep.subr.bf16.mxu0 0
    %726 = vmatpush1.bf16.msra.mxu0 %v691
    %727 = vmatprep.subr.bf16.mxu0 0
    %728 = vmatpush1.bf16.msra.mxu0 %v690
    %729 = vmatprep.subr.bf16.mxu0 0
    %730 = vmatpush1.bf16.msra.mxu0 %v689
    %731 = vmatprep.subr.bf16.mxu0 0
    %732 = vmatpush1.bf16.msra.mxu0 %v688
    %733 = vmatprep.subr.bf16.mxu0 0
    %734 = vmatpush1.bf16.msra.mxu0 %v687
    %735 = vmatprep.subr.bf16.mxu0 0
    %736 = vmatpush2.bf16.msra.mxu0 %v702
    %737 = vmatprep.subr.bf16.mxu0 0
    %738 = vmatpush2.bf16.msra.mxu0 %v701
    %739 = vmatprep.subr.bf16.mxu0 0
    %740 = vmatpush2.bf16.msra.mxu0 %v700
    %741 = vmatprep.subr.bf16.mxu0 0
    %742 = vmatpush2.bf16.msra.mxu0 %v699
    %743 = vmatprep.subr.bf16.mxu0 0
    %744 = vmatpush2.bf16.msra.mxu0 %v698
    %745 = vmatprep.subr.bf16.mxu0 0
    %746 = vmatpush2.bf16.msra.mxu0 %v697
    %747 = vmatprep.subr.bf16.mxu0 0
    %748 = vmatpush2.bf16.msra.mxu0 %v696
    %749 = vmatprep.subr.bf16.mxu0 0
    %750 = vmatpush2.bf16.msra.mxu0 %v695
    %751 = vmatprep.mubr.bf16.mxu0 %v583
    %752 = vmatmul.mubr.bf16.gmra.mxu0 %v582
    %v753 = vpop.f32.mrf.mxu0
    %v754 = vadd.f32 %v621, %v753
    %v755 = vpop.f32.mrf.mxu0
    %v756 = vpop.f32.mrf.mxu0
    %v757 = vpop.f32.mrf.mxu0
    %758 = vdwg.mxu0
    %vm759 = vcmp.gt.f32.partialorder %v754, 0.0
    %v760 = vmul.f32 %v754, 0.01
    %v761 = vsel %vm759, %v754, %v760
    %vm762 = vcmask 15360
    %763 = vst.msk [vmem:[%s13] sm:$0xff] %vm762, %v761
    // Predicated region
    $region74: #{tpu_custom_call.1} parent=1 // pred_check
      _
    $region75: #{tpu_custom_call.1} parent=1 // pred_check_branch
      %765 = sbr.rel (0) target = $region77
    $region76: #{tpu_custom_call.1} parent=1 // pred_region
      _
    $region77: #{tpu_custom_call.1} parent=1 // pred_fallthru
      _
    // Predicated region
    $region78: #{tpu_custom_call.1} parent=1 // pred_check
      _
    $region79: #{tpu_custom_call.1} parent=1 // pred_check_branch
      %767 = sbr.rel (0) target = $region81
    $region80: #{tpu_custom_call.1} parent=1 // pred_region
      _
    $region81: #{tpu_custom_call.1} parent=1 // pred_fallthru
      _
    %768 = vsyncpa [#allocation3], 1
    %769 = vsyncpa [#allocation5], 1
    %770 = vsyncpa [#allocation8], 1

</llo_original>
